<compile_context>
chip_gen: v7x
topology: tpu7x:2x2x1
jax: 0.10.0
libtpu: 0.0.40
codegen_flags: <defaults>
</compile_context>

<pallas_src>
import functools

import jax
import jax.numpy as jnp
from jax.experimental import pallas as pl
from jax.experimental.pallas import tpu as pltpu


# ----------------------------- tiling helpers -------------------------------

def _round_up(x, m):
    return ((x + m - 1) // m) * m


def _node_padding(n, pref=256):
    """Padded node count and row-tile size (sublane axis, bf16-packed)."""
    if n >= pref:
        return _round_up(n, pref), pref
    p = _round_up(n, 16)
    return p, p


def _lane_padding(d, pref=256):
    """Padded feature count (multiple of 128) and lane-tile size."""
    p = _round_up(d, 128)
    if p % pref == 0:
        return p, pref
    return p, 128


def _node_k_tile(n_pad, tm):
    """k-tile along the node axis of the aggregation matmul."""
    if n_pad % 512 == 0:
        return 512
    if n_pad % 256 == 0:
        return 256
    return tm  # small-N case: tm == n_pad (full extent)


def _feat_k_tile(f_pad):
    for t in (512, 256, 128):
        if f_pad % t == 0:
            return t
    return f_pad


_COMPILER_PARAMS = pltpu.CompilerParams(
    dimension_semantics=("parallel", "parallel", "arbitrary"),
    vmem_limit_bytes=32 * 1024 * 1024,
)


# ------------------------------- kernels -------------------------------------

def _matmul_scale_kernel(x_ref, w_ref, dinv_ref, o_ref, acc_ref):
    """acc += X @ W (MXU, f32 acc); finalize: o = dinv * acc."""
    @pl.when(pl.program_id(2) == 0)
    def _():
        acc_ref[...] = jnp.zeros_like(acc_ref)

    acc_ref[...] += jnp.dot(x_ref[...], w_ref[...],
                            preferred_element_type=jnp.float32)

    @pl.when(pl.program_id(2) == pl.num_programs(2) - 1)
    def _():
        o_ref[...] = (dinv_ref[...] * acc_ref[...]).astype(o_ref.dtype)


def _aggregate_kernel(a_ref, xw_ref, dinv_ref, b_ref, o_ref, acc_ref,
                      *, apply_relu):
    """acc += A @ XWd; finalize: o = act(dinv * acc + b)."""
    @pl.when(pl.program_id(2) == 0)
    def _():
        acc_ref[...] = jnp.zeros_like(acc_ref)

    acc_ref[...] += jnp.dot(a_ref[...], xw_ref[...],
                            preferred_element_type=jnp.float32)

    @pl.when(pl.program_id(2) == pl.num_programs(2) - 1)
    def _():
        h = dinv_ref[...] * acc_ref[...] + b_ref[...]
        if apply_relu:
            h = jnp.maximum(h, 0.0)
        o_ref[...] = h.astype(o_ref.dtype)


# ------------------------------- wrappers -------------------------------------

def _feature_transform(x, w, dinv, *, tm, tn, tk):
    """XWd = dinv ⊙ (x @ w); bf16 output (feeds the aggregation kernel)."""
    n, f = x.shape
    _, d = w.shape
    grid = (n // tm, d // tn, f // tk)
    out_dtype = jnp.bfloat16
    cost = pl.CostEstimate(
        flops=2 * n * f * d,
        transcendentals=0,
        bytes_accessed=int(n * f * 2 + f * d * 2 + n * d * 2 + n * 4),
    )
    return pl.pallas_call(
        _matmul_scale_kernel,
        out_shape=jax.ShapeDtypeStruct((n, d), out_dtype),
        grid_spec=pltpu.PrefetchScalarGridSpec(
            num_scalar_prefetch=0,
            grid=grid,
            in_specs=[
                pl.BlockSpec((tm, tk), lambda i, j, k: (i, k)),
                pl.BlockSpec((tk, tn), lambda i, j, k: (k, j)),
                pl.BlockSpec((tm, 1), lambda i, j, k: (i, 0)),
            ],
            out_specs=pl.BlockSpec((tm, tn), lambda i, j, k: (i, j)),
            scratch_shapes=[pltpu.VMEM((tm, tn), jnp.float32)],
        ),
        compiler_params=_COMPILER_PARAMS,
        cost_estimate=cost,
    )(x, w, dinv)


def _aggregate(a, xw, dinv, b, *, tm, tn, tk, apply_relu, out_dtype):
    """h' = act(dinv ⊙ (a @ xw) + b); tiled over (rows, cols, k=nodes)."""
    n, _ = a.shape
    _, d = xw.shape
    grid = (n // tm, d // tn, n // tk)
    kernel = functools.partial(_aggregate_kernel, apply_relu=apply_relu)
    out_bytes = jnp.dtype(out_dtype).itemsize
    cost = pl.CostEstimate(
        flops=2 * n * n * d,
        transcendentals=0,
        bytes_accessed=int(n * n * 2 + n * d * 2 + n * d * out_bytes
                           + n * 4 + d * 4),
    )
    return pl.pallas_call(
        kernel,
        out_shape=jax.ShapeDtypeStruct((n, d), out_dtype),
        grid_spec=pltpu.PrefetchScalarGridSpec(
            num_scalar_prefetch=0,
            grid=grid,
            in_specs=[
                pl.BlockSpec((tm, tk), lambda i, j, k: (i, k)),
                pl.BlockSpec((tk, tn), lambda i, j, k: (k, j)),
                pl.BlockSpec((tm, 1), lambda i, j, k: (i, 0)),
                pl.BlockSpec((1, tn), lambda i, j, k: (0, j)),
            ],
            out_specs=pl.BlockSpec((tm, tn), lambda i, j, k: (i, j)),
            scratch_shapes=[pltpu.VMEM((tm, tn), jnp.float32)],
        ),
        compiler_params=_COMPILER_PARAMS,
        cost_estimate=cost,
    )(a, xw, dinv, b)


# ------------------------------ GCN forward -----------------------------------

def init_gcn_params(key, n_layers, feature_len, dim):
    """Deterministic glorot-uniform weights, zero biases (GraphConv shapes)."""
    weights, biases = [], []
    for i in range(n_layers):
        fin = feature_len if i == 0 else dim
        key, sub = jax.random.split(key)
        limit = jnp.sqrt(6.0 / (fin + dim))
        w = jax.random.uniform(sub, (fin, dim), jnp.float32, -limit, limit)
        weights.append(w)
        biases.append(jnp.zeros((dim,), jnp.float32))
    return weights, biases


def gnn_forward(adj, feat, weights, biases):
    """GNN.forward for gnn='gcn': per-layer GraphConv; relu on all but last."""
    n = adj.shape[0]
    d_out = weights[-1].shape[1]
    n_layers = len(weights)

    # DGL norm='both': dinv = deg^{-1/2}, zeroed for isolated nodes.
    deg = jnp.sum(adj, axis=1)
    dinv = jnp.where(deg > 0, jax.lax.rsqrt(jnp.maximum(deg, 1.0)), 0.0)

    n_pad, tm = _node_padding(n)
    tk_n = _node_k_tile(n_pad, tm)

    a_p = jnp.zeros((n_pad, n_pad), jnp.bfloat16)
    a_p = a_p.at[:n, :n].set(adj.astype(jnp.bfloat16))
    dinv_p = jnp.zeros((n_pad, 1), jnp.float32).at[:n, 0].set(dinv)

    h = feat.astype(jnp.bfloat16)
    for i, (w, b) in enumerate(zip(weights, biases)):
        fin, fout = w.shape
        fin_pad, _ = _lane_padding(fin)
        fout_pad, tn = _lane_padding(fout)
        tkf = _feat_k_tile(fin_pad)

        if h.shape != (n_pad, fin_pad):
            h_p = jnp.zeros((n_pad, fin_pad), jnp.bfloat16)
            h_p = h_p.at[:h.shape[0], :h.shape[1]].set(h)
        else:
            h_p = h
        w_p = jnp.zeros((fin_pad, fout_pad), jnp.bfloat16)
        w_p = w_p.at[:fin, :fout].set(w.astype(jnp.bfloat16))
        b_p = jnp.zeros((1, fout_pad), jnp.float32).at[0, :fout].set(b)

        last = (i == n_layers - 1)
        xwd = _feature_transform(h_p, w_p, dinv_p, tm=tm, tn=tn, tk=tkf)
        h = _aggregate(a_p, xwd, dinv_p, b_p, tm=tm, tn=tn, tk=tk_n,
                       apply_relu=not last,
                       out_dtype=jnp.float32 if last else jnp.bfloat16)

    return h[:n, :d_out]


# ------------------------------ references ------------------------------------

def gnn_forward_ref_quantized(adj, feat, weights, biases):
    """Pure-JAX reference mirroring the kernel's bf16 storage/inputs."""
    def q(x):
        return x.astype(jnp.bfloat16).astype(jnp.float32)

    deg = jnp.sum(adj, axis=1)
    dinv = jnp.where(deg > 0, jax.lax.rsqrt(jnp.maximum(deg, 1.0)), 0.0)
    a = q(adj)
    h = q(feat)
    n_layers = len(weights)
    for i, (w, b) in enumerate(zip(weights, biases)):
        xwd = q(dinv[:, None] * (h @ q(w)))      # XWd stored as bf16
        h = dinv[:, None] * (a @ xwd) + b[None, :]
        if i != n_layers - 1:
            h = q(jnp.maximum(h, 0.0))           # inter-layer h stored as bf16
    return h


def gnn_forward_ref_f32(adj, feat, weights, biases):
    """Pure-f32 semantic reference (exact GraphConv norm='both' math)."""
    deg = jnp.sum(adj, axis=1)
    dinv = jnp.where(deg > 0, jax.lax.rsqrt(jnp.maximum(deg, 1.0)), 0.0)
    anorm = adj * dinv[:, None] * dinv[None, :]
    h = feat
    n_layers = len(weights)
    for i, (w, b) in enumerate(zip(weights, biases)):
        h = anorm @ (h @ w) + b[None, :]
        if i != n_layers - 1:
            h = jnp.maximum(h, 0.0)
    return h


# --------------------------------- demo ---------------------------------------

if __name__ == "__main__":
    # Small synthetic graph: N nodes, feature_len-dim input features.
    N = 16
    FEATURE_LEN = 32
    DIM = 32
    N_LAYERS = 2

    key = jax.random.PRNGKey(0)
    k_adj, k_feat, k_param = jax.random.split(key, 3)

    # Random symmetric adjacency with self-loops.
    rnd = jax.random.uniform(k_adj, (N, N))
    adj = (rnd < 0.3).astype(jnp.float32)
    adj = jnp.maximum(adj, adj.T)
    adj = jnp.maximum(adj, jnp.eye(N, dtype=jnp.float32))

    feat = jax.random.normal(k_feat, (N, FEATURE_LEN), jnp.float32)
    weights, biases = init_gcn_params(k_param, N_LAYERS, FEATURE_LEN, DIM)

    out = gnn_forward(adj, feat, weights, biases)
    out = jax.block_until_ready(out)
    assert out.shape == (N, DIM)

    ref_q = gnn_forward_ref_quantized(adj, feat, weights, biases)
    ref_f = gnn_forward_ref_f32(adj, feat, weights, biases)
    assert jnp.allclose(out, ref_q, atol=1e-2, rtol=1e-2), "mismatch vs quantized ref"
    assert jnp.allclose(out, ref_f, atol=1e-1, rtol=1e-1), "mismatch vs f32 ref"

    print("KERNEL_OK")
</pallas_src>

<mosaic_0001>
module attributes {stable_mosaic.version = 11 : i64} {
  func.func @_matmul_scale_kernel(%arg0: i32, %arg1: i32, %arg2: i32, %arg3: memref<16x128xbf16, #tpu.memory_space<vmem>>, %arg4: memref<128x128xbf16, #tpu.memory_space<vmem>>, %arg5: memref<16x1xf32, #tpu.memory_space<vmem>>, %arg6: memref<16x128xbf16, #tpu.memory_space<vmem>>, %arg7: memref<16x128xf32, #tpu.memory_space<vmem>>) attributes {dimension_semantics = [#tpu.dimension_semantics<parallel>, #tpu.dimension_semantics<parallel>, #tpu.dimension_semantics<arbitrary>], iteration_bounds = array<i64: 1, 1, 1>, scalar_prefetch = 0 : i64, scratch_operands = 1 : i64, tpu.core_type = #tpu.core_type<tc>, window_params = [{transform_indices = @transform_0, window_bounds = array<i64: 16, 128>}, {transform_indices = @transform_1, window_bounds = array<i64: 128, 128>}, {transform_indices = @transform_2, window_bounds = array<i64: 16, 1>}, {transform_indices = @transform_3, window_bounds = array<i64: 16, 128>}]} {
    %c0_i32 = arith.constant 0 : i32
    %0 = arith.cmpi eq, %arg2, %c0_i32 : i32
    %1 = arith.extui %0 : i1 to i32
    %c0_i32_0 = arith.constant 0 : i32
    %2 = arith.cmpi ne, %1, %c0_i32_0 : i32
    scf.if %2 {
      %cst_10 = arith.constant 0.000000e+00 : f32
      %12 = vector.broadcast %cst_10 : f32 to vector<16x128xf32>
      %c0_11 = arith.constant 0 : index
      %c0_12 = arith.constant 0 : index
      %13 = vector.load %arg7[%c0_11, %c0_12] : memref<16x128xf32, #tpu.memory_space<vmem>>, vector<16x128xf32>
      tpu.vector_store %arg7[%c0_11, %c0_12], %12 {strides = array<i32>} : memref<16x128xf32, #tpu.memory_space<vmem>>, vector<16x128xf32>,
    } else {
    }
    %c0 = arith.constant 0 : index
    %c0_1 = arith.constant 0 : index
    %3 = vector.load %arg7[%c0, %c0_1] : memref<16x128xf32, #tpu.memory_space<vmem>>, vector<16x128xf32>
    %c0_2 = arith.constant 0 : index
    %c0_3 = arith.constant 0 : index
    %4 = vector.load %arg3[%c0_2, %c0_3] : memref<16x128xbf16, #tpu.memory_space<vmem>>, vector<16x128xbf16>
    %c0_4 = arith.constant 0 : index
    %c0_5 = arith.constant 0 : index
    %5 = vector.load %arg4[%c0_4, %c0_5] : memref<128x128xbf16, #tpu.memory_space<vmem>>, vector<128x128xbf16>
    %cst = arith.constant dense<0.000000e+00> : vector<16x128xf32>
    %6 = tpu.matmul %4, %5, %cst {dimension_numbers = #tpu.dot_dimension_numbers<[1], [0], [0], [1], [0, 0, 1, 1], [], []>} : vector<16x128xbf16>, vector<128x128xbf16>, vector<16x128xf32> -> vector<16x128xf32>
    %7 = arith.addf %3, %6 : vector<16x128xf32>
    %c0_6 = arith.constant 0 : index
    %c0_7 = arith.constant 0 : index
    %8 = vector.load %arg7[%c0_6, %c0_7] : memref<16x128xf32, #tpu.memory_space<vmem>>, vector<16x128xf32>
    tpu.vector_store %arg7[%c0_6, %c0_7], %7 {strides = array<i32>} : memref<16x128xf32, #tpu.memory_space<vmem>>, vector<16x128xf32>,
    %c0_i32_8 = arith.constant 0 : i32
    %9 = arith.cmpi eq, %arg2, %c0_i32_8 : i32
    %10 = arith.extui %9 : i1 to i32
    %c0_i32_9 = arith.constant 0 : i32
    %11 = arith.cmpi ne, %10, %c0_i32_9 : i32
    scf.if %11 {
      %c0_10 = arith.constant 0 : index
      %c0_11 = arith.constant 0 : index
      %12 = vector.load %arg5[%c0_10, %c0_11] : memref<16x1xf32, #tpu.memory_space<vmem>>, vector<16x1xf32>
      %c0_12 = arith.constant 0 : index
      %c0_13 = arith.constant 0 : index
      %13 = vector.load %arg7[%c0_12, %c0_13] : memref<16x128xf32, #tpu.memory_space<vmem>>, vector<16x128xf32>
      %14 = vector.broadcast %12 : vector<16x1xf32> to vector<16x128xf32>
      %15 = arith.mulf %14, %13 : vector<16x128xf32>
      %16 = arith.truncf %15 : vector<16x128xf32> to vector<16x128xbf16>
      %c0_14 = arith.constant 0 : index
      %c0_15 = arith.constant 0 : index
      %17 = vector.load %arg6[%c0_14, %c0_15] : memref<16x128xbf16, #tpu.memory_space<vmem>>, vector<16x128xbf16>
      tpu.vector_store %arg6[%c0_14, %c0_15], %16 {strides = array<i32>} : memref<16x128xbf16, #tpu.memory_space<vmem>>, vector<16x128xbf16>,
    } else {
    }
    return
  }
  func.func @transform_0(%arg0: i32, %arg1: i32, %arg2: i32) -> (i32, i32) {
    %c0_i32 = arith.constant 0 : i32
    return %arg0, %arg2 : i32, i32
  }
  func.func @transform_1(%arg0: i32, %arg1: i32, %arg2: i32) -> (i32, i32) {
    %c0_i32 = arith.constant 0 : i32
    return %arg2, %arg1 : i32, i32
  }
  func.func @transform_2(%arg0: i32, %arg1: i32, %arg2: i32) -> (i32, i32) {
    %c0_i32 = arith.constant 0 : i32
    %c0_i32_0 = arith.constant 0 : i32
    return %arg0, %c0_i32 : i32, i32
  }
  func.func @transform_3(%arg0: i32, %arg1: i32, %arg2: i32) -> (i32, i32) {
    %c0_i32 = arith.constant 0 : i32
    return %arg0, %arg1 : i32, i32
  }
}

</mosaic_0001>

<llo_original>
// kernel: tpu_custom_call.1
$region0: #{tpu_custom_call.1}
  #allocation0 [shape = 'u32[]', space=smem, size = 0x4, offset = 0x4, fixed_abs, tag = 'smem constant byte address 0x4 - core index']
  #allocation1 [shape = 'u32[144,128]{1,0:T(1,128)}', space=vmem, size = 0x12000, scoped, tag = 'internal scratch']
  #allocation2 [shape = 'f32[16,128]{1,0:T(8,128)}', space=vmem, size = 0x2000, scoped, tag = 'scratch operand']
  %s0 = inlined_call_operand.vmem [shape: bf16[16,128], index: 0, kind: input, shape index: {}]
  %s1 = inlined_call_operand.hbm [shape: bf16[128,128], index: 1, kind: input, shape index: {}]
  %s2 = inlined_call_operand.vmem [shape: f32[16,1], index: 2, kind: input, shape index: {}]
  %s3 = inlined_call_operand.hbm [shape: bf16[16,128], index: 3, kind: output, shape index: {}]
  %s4 = sld [smem:[#allocation0]]
  $region34: #{tpu_custom_call.1} parent=0
    _
  %s6 = ssub.s32 1, %s4
  %s7 = scalar_select 0, %s6, %s4
  $region1: #{tpu_custom_call.1} parent=0
    #allocation3 [shape = 'u8[32768]{0}', space=vmem, size = 0x8000, scoped, tag = 'input window, operand 1, single buffered']
    #allocation4 [shape = 's32[1]{0}', space=sflag, size = 0x4, scoped, tag = 'scoped memory for tpu_custom_call.1']
    #allocation5 [shape = 's32[1]{0}', space=sflag, size = 0x4, scoped, tag = 'scoped memory for tpu_custom_call.1']
    #allocation6 [shape = 'u8[4096]{0}', space=vmem, size = 0x1000, scoped, tag = 'output window, operand 0, single buffered']
    %8 = vsyncpa [#allocation4], 0
    %9 = vsyncpa [#allocation5], 0
    // Predicated region
    $region2: #{tpu_custom_call.1} parent=1 // pred_check
      _
    $region3: #{tpu_custom_call.1} parent=1 // pred_check_branch
      %11 = sbr.rel (0) target = $region5
    $region4: #{tpu_custom_call.1} parent=1 // pred_region
      _
    $region5: #{tpu_custom_call.1} parent=1 // pred_fallthru
      _
    // Predicated region
    $region6: #{tpu_custom_call.1} parent=1 // pred_check
      _
    $region7: #{tpu_custom_call.1} parent=1 // pred_check_branch
      %13 = sbr.rel (0) target = $region9
    $region8: #{tpu_custom_call.1} parent=1 // pred_region
      %s15 = ssub.s32 1024, 1024
      %16 = vsyncadd [#allocation4], %s15
      %s17 = sshll.u32 [#allocation3], 4
      %s18 = int_to_ptr.vmem [resolvable:$true] %s17
      %23 = dma.hbm_to_vmem [thread:$0]  %s1, 1024, %s18, [#allocation4], 64, 64, 4
    $region9: #{tpu_custom_call.1} parent=1 // pred_fallthru
      _
    // Predicated region
    $region10: #{tpu_custom_call.1} parent=1 // pred_check
      _
    $region11: #{tpu_custom_call.1} parent=1 // pred_check_branch
      %25 = sbr.rel (0) target = $region13
    $region12: #{tpu_custom_call.1} parent=1 // pred_region
      _
    $region13: #{tpu_custom_call.1} parent=1 // pred_fallthru
      _
    // Predicated region
    $region14: #{tpu_custom_call.1} parent=1 // pred_check
      _
    $region15: #{tpu_custom_call.1} parent=1 // pred_check_branch
      %27 = sbr.rel (0) target = $region17
    $region16: #{tpu_custom_call.1} parent=1 // pred_region
      %28 = dma.done [#allocation4], 1024
    $region17: #{tpu_custom_call.1} parent=1 // pred_fallthru
      _
    %p30 = scmp.eq.s32.totalorder 0, 0
    // Predicated region
    $region18: #{tpu_custom_call.1} parent=1 // pred_check
      %p31 = pneg %p30
    $region19: #{tpu_custom_call.1} parent=1 // pred_check_branch
      %33 = sbr.rel (%p31) target = $region21
    $region20: #{tpu_custom_call.1} parent=1 // pred_region
      %34 = vst [vmem:[#allocation2] sm:$0xff] 0.0
      %35 = vst [vmem:[#allocation2 + $0x8] sm:$0xff] 0.0
    $region21: #{tpu_custom_call.1} parent=1 // pred_fallthru
      _
    %v36 = vld [vmem:[#allocation2] sm:$0xff]
    %v37 = vld [vmem:[#allocation2 + $0x8] sm:$0xff]
    %v38 = vld [vmem:[%s0] sm:$0xf]
    %v39 = vld [vmem:[%s0 + $0x4] sm:$0xf]
    %v40 = vld [vmem:[#allocation3] sm:$0xf]
    %v41 = vld [vmem:[#allocation3 + $0x4] sm:$0xf]
    %v42 = vld [vmem:[#allocation3 + $0x8] sm:$0xf]
    %v43 = vld [vmem:[#allocation3 + $0xc] sm:$0xf]
    %v44 = vld [vmem:[#allocation3 + $0x10] sm:$0xf]
    %v45 = vld [vmem:[#allocation3 + $0x14] sm:$0xf]
    %v46 = vld [vmem:[#allocation3 + $0x18] sm:$0xf]
    %v47 = vld [vmem:[#allocation3 + $0x1c] sm:$0xf]
    %v48 = vld [vmem:[#allocation3 + $0x20] sm:$0xf]
    %v49 = vld [vmem:[#allocation3 + $0x24] sm:$0xf]
    %v50 = vld [vmem:[#allocation3 + $0x28] sm:$0xf]
    %v51 = vld [vmem:[#allocation3 + $0x2c] sm:$0xf]
    %v52 = vld [vmem:[#allocation3 + $0x30] sm:$0xf]
    %v53 = vld [vmem:[#allocation3 + $0x34] sm:$0xf]
    %v54 = vld [vmem:[#allocation3 + $0x38] sm:$0xf]
    %v55 = vld [vmem:[#allocation3 + $0x3c] sm:$0xf]
    %v58 = vunpack.c.l.b16 %v38
    %v59 = vunpack.c.l.b16 %v39
    %v60 = vpack.c.b16 %v59, %v58
    %v78 = vunpack.c.l.b16 %v40
    %v79 = vunpack.c.l.b16 %v41
    %v80 = vunpack.c.l.b16 %v42
    %v81 = vunpack.c.l.b16 %v43
    %v82 = vunpack.c.l.b16 %v44
    %v83 = vunpack.c.l.b16 %v45
    %v84 = vunpack.c.l.b16 %v46
    %v85 = vunpack.c.l.b16 %v47
    %v86 = vunpack.c.l.b16 %v48
    %v87 = vunpack.c.l.b16 %v49
    %v88 = vunpack.c.l.b16 %v50
    %v89 = vunpack.c.l.b16 %v51
    %v90 = vunpack.c.l.b16 %v52
    %v91 = vunpack.c.l.b16 %v53
    %v92 = vunpack.c.l.b16 %v54
    %v93 = vunpack.c.l.b16 %v55
    %v94 = vpack.c.b16 %v79, %v78
    %v95 = vpack.c.b16 %v81, %v80
    %v96 = vpack.c.b16 %v83, %v82
    %v97 = vpack.c.b16 %v85, %v84
    %v98 = vpack.c.b16 %v87, %v86
    %v99 = vpack.c.b16 %v89, %v88
    %v100 = vpack.c.b16 %v91, %v90
    %v101 = vpack.c.b16 %v93, %v92
    %110 = vmatprep.subr.bf16.mxu0 0
    %111 = vmatpush1.bf16.msra.mxu0 %v94
    %112 = vmatprep.subr.bf16.mxu0 0
    %113 = vmatpush1.bf16.msra.mxu0 %v95
    %114 = vmatprep.subr.bf16.mxu0 0
    %115 = vmatpush1.bf16.msra.mxu0 %v96
    %116 = vmatprep.subr.bf16.mxu0 0
    %117 = vmatpush1.bf16.msra.mxu0 %v97
    %118 = vmatprep.subr.bf16.mxu0 0
    %119 = vmatpush1.bf16.msra.mxu0 %v98
    %120 = vmatprep.subr.bf16.mxu0 0
    %121 = vmatpush1.bf16.msra.mxu0 %v99
    %122 = vmatprep.subr.bf16.mxu0 0
    %123 = vmatpush1.bf16.msra.mxu0 %v100
    %124 = vmatprep.subr.bf16.mxu0 0
    %125 = vmatpush1.bf16.msra.mxu0 %v101
    %126 = vmatprep.subr.bf16.mxu0 0
    %127 = vmatpush1.bf16.msra.mxu0 0
    %128 = vmatprep.subr.bf16.mxu0 0
    %129 = vmatpush1.bf16.msra.mxu0 0
    %130 = vmatprep.subr.bf16.mxu0 0
    %131 = vmatpush1.bf16.msra.mxu0 0
    %132 = vmatprep.subr.bf16.mxu0 0
    %133 = vmatpush1.bf16.msra.mxu0 0
    %134 = vmatprep.subr.bf16.mxu0 0
    %135 = vmatpush1.bf16.msra.mxu0 0
    %136 = vmatprep.subr.bf16.mxu0 0
    %137 = vmatpush1.bf16.msra.mxu0 0
    %138 = vmatprep.subr.bf16.mxu0 0
    %139 = vmatpush1.bf16.msra.mxu0 0
    %140 = vmatprep.subr.bf16.mxu0 0
    %141 = vmatpush1.bf16.msra.mxu0 0
    %142 = vmatprep.mubr.bf16.mxu0 0
    %143 = vmatmul.mubr.bf16.gmra.mrb[0].mxu0 %v60
    %v144 = vpop.f32.mrb[0].mxu0
    %v145 = vadd.f32 0.0, %v144
    %v146 = vpop.f32.mrb[0].mxu0
    %v147 = vpop.f32.mrb[0].mxu0
    %v148 = vadd.f32 0.0, %v147
    %v149 = vpop.f32.mrb[0].mxu0
    %150 = vdwg.mxu0
    %v151 = vadd.f32 %v36, %v145
    %v152 = vadd.f32 %v37, %v148
    %153 = vst [vmem:[#allocation2] sm:$0xff] %v151
    %154 = vst [vmem:[#allocation2 + $0x8] sm:$0xff] %v152
    // Predicated region
    $region22: #{tpu_custom_call.1} parent=1 // pred_check
      %p155 = pneg %p30
    $region23: #{tpu_custom_call.1} parent=1 // pred_check_branch
      %157 = sbr.rel (%p155) target = $region25
    $region24: #{tpu_custom_call.1} parent=1 // pred_region
      %v158 = vld [vmem:[%s2] sm:$0xff]
      %v159 = vld [vmem:[%s2 + $0x8] sm:$0xff]
      %v160 = vld [vmem:[#allocation2] sm:$0xff]
      %v161 = vld [vmem:[#allocation2 + $0x8] sm:$0xff]
      %163 = vset.pattern.permute.xlu0 0
      %164 = vperm.xlu0 %163, %v158
      %v165 = vpop.permute.xlu0 %164
      %168 = vset.pattern.permute.xlu0 0
      %169 = vperm.xlu0 %168, %v159
      %v170 = vpop.permute.xlu0 %169
      %v172 = vmul.f32 %v165, %v160
      %v173 = vmul.f32 %v170, %v161
      %v174 = vpack.c.bf16 %v173, %v172
      %v176 = vunpack.c.l.b16 %v174
      %v177 = vunpack.c.h.b16 %v174
      %v178 = vpack.c.b16 %v176, %v176
      %v179 = vpack.c.b16 %v177, %v177
      %182 = vst [vmem:[#allocation6] sm:$0xf] %v178
      %183 = vst [vmem:[#allocation6 + $0x4] sm:$0xf] %v179
    $region25: #{tpu_custom_call.1} parent=1 // pred_fallthru
      _
    // Predicated region
    $region26: #{tpu_custom_call.1} parent=1 // pred_check
      _
    $region27: #{tpu_custom_call.1} parent=1 // pred_check_branch
      %185 = sbr.rel (0) target = $region29
    $region28: #{tpu_custom_call.1} parent=1 // pred_region
      %s187 = ssub.s32 128, 128
      %188 = vsyncadd [#allocation5], %s187
      %s189 = sshll.u32 [#allocation6], 4
      %s190 = int_to_ptr.vmem [resolvable:$true] %s189
      %195 = dma.vmem_to_hbm [thread:$0]  %s190, 128, %s3, [#allocation5], 64, 64, 4
    $region29: #{tpu_custom_call.1} parent=1 // pred_fallthru
      _
    // Predicated region
    $region30: #{tpu_custom_call.1} parent=1 // pred_check
      _
    $region31: #{tpu_custom_call.1} parent=1 // pred_check_branch
      %197 = sbr.rel (0) target = $region33
    $region32: #{tpu_custom_call.1} parent=1 // pred_region
      %198 = dma.done [#allocation5], 128
    $region33: #{tpu_custom_call.1} parent=1 // pred_fallthru
      _
    %199 = vsyncpa [#allocation4], 1
    %200 = vsyncpa [#allocation5], 1

</llo_original>
